<compile_context>
chip_gen: v5e
topology: v5e:2x2
jax: 0.10.0
libtpu: 0.0.40
codegen_flags: <defaults>
</compile_context>

<pallas_src>
import functools

import jax
import jax.numpy as jnp
from jax import lax
from jax.experimental import pallas as pl
from jax.experimental.pallas import tpu as pltpu

_LANE = 128
_SUB = 8

# sum-plane indices (order shared between kernel and epilogue)
(_WCOV, _EFF, _BC, _MPIW, _NORM, _SMALL, _LARGE,
 _BC_S, _BC_L, _MPIW_S, _MPIW_L) = range(11)
_N_BASE = 11          # planes always produced
_N_FULL = _N_BASE + 8 # + 4 covered-per-coord + 4 scaled-width-per-coord


def _fold(x, op):
    """Reduce (R, 128) -> (8, 128) by folding 8-row slabs elementwise (VALU only).

    Pass-through when R <= 8 or R is not a multiple of 8 (single-tile odd case).
    """
    r = x.shape[0]
    if r <= _SUB or (r % _SUB) != 0:
        return x
    acc = x[0:_SUB]
    for i in range(_SUB, r, _SUB):
        acc = op(acc, x[i:i + _SUB])
    return acc


def _size_aware_kernel(tau_ref, pred_ref, gt_ref, w_ref, *out_refs,
                       n_boxes, rows, num_tiles, needs_mask, components,
                       small_threshold, large_threshold,
                       size_normalization, coverage_loss_type,
                       smooth_l1_beta, huber_delta, approx_reciprocal):
    if components:
        sums_ref, wmin_ref, wmax_ref = out_refs
    else:
        (sums_ref,) = out_refs

    t = pl.program_id(0)
    tau = tau_ref[0]

    pred = pred_ref[...]   # (4, R, 128): rows = x1,y1,x2,y2 ; (R,128) lane-dense boxes
    gt = gt_ref[...]
    w = w_ref[...]

    def emit(masked):
        scaled = w * tau
        upper_viol = jnp.maximum(gt - (pred + scaled), 0.0)   # gt above upper bound
        lower_viol = jnp.maximum((pred - scaled) - gt, 0.0)   # gt below lower bound
        viol = upper_viol + lower_viol                        # (4,R,128), >= 0

        if coverage_loss_type == 'smooth_l1':
            cov_pc = jnp.where(viol < smooth_l1_beta,
                               0.5 * viol * viol / smooth_l1_beta,
                               viol - 0.5 * smooth_l1_beta)
        elif coverage_loss_type == 'huber':
            cov_pc = jnp.where(viol <= huber_delta,
                               0.5 * viol * viol,
                               huber_delta * (viol - 0.5 * huber_delta))
        else:
            cov_pc = viol * viol

        cov_per_box = (cov_pc[0] + cov_pc[1] + cov_pc[2] + cov_pc[3]) * 0.25
        mpiw = (scaled[0] + scaled[1] + scaled[2] + scaled[3]) * 0.5  # mean of 2*scaled

        bw = gt[2] - gt[0]
        bh = gt[3] - gt[1]
        area = bw * bh
        # sqrt(area) < thr  <=>  0 <= area < thr**2.  The nonneg guard keeps
        # degenerate boxes (NaN size in torch) in the medium bucket.
        nonneg = area >= 0.0
        small = ((area < small_threshold * small_threshold) & nonneg).astype(jnp.float32)
        large = (area > large_threshold * large_threshold).astype(jnp.float32)

        if components:
            covered = (viol <= 0.0).astype(jnp.float32)       # (4,R,128)
            box_covered = covered[0] * covered[1] * covered[2] * covered[3]
        else:
            covered = None
            box_covered = ((viol[0] + viol[1] + viol[2] + viol[3]) <= 0.0
                           ).astype(jnp.float32)

        cov_w = 1.0 + 0.5 * small - 0.3 * large               # 1.5 / 1.0 / 0.7
        weighted_cov = cov_per_box * cov_w

        if size_normalization:
            obj = (bw + bh) * 0.5 + 1.0
            if approx_reciprocal:
                norm_mpiw = mpiw * pl.reciprocal(obj, approx=True)   # EUP, VALU-free
            else:
                norm_mpiw = mpiw / obj
            eff_w = 1.0 - 0.5 * small + 1.0 * large           # 0.5 / 1.0 / 2.0
            eff = norm_mpiw * eff_w
            norm_stat = norm_mpiw
        else:
            eff = mpiw
            norm_stat = mpiw

        if masked:
            row = lax.broadcasted_iota(jnp.int32, (rows, _LANE), 0)
            lane = lax.broadcasted_iota(jnp.int32, (rows, _LANE), 1)
            gidx = (t * rows + row) * _LANE + lane
            valid = gidx < n_boxes

            def msk(x, fill=0.0):
                # select (not multiply): safe even against inf/NaN garbage in
                # a ragged last block's out-of-bounds region.
                return jnp.where(valid, x, fill)
        else:
            def msk(x, fill=0.0):
                return x

        n_planes = _N_FULL if components else _N_BASE
        planes = [None] * n_planes
        planes[_WCOV] = msk(weighted_cov)
        planes[_EFF] = msk(eff)
        planes[_BC] = msk(box_covered)
        planes[_MPIW] = msk(mpiw)
        planes[_NORM] = msk(norm_stat)
        planes[_SMALL] = msk(small)
        planes[_LARGE] = msk(large)
        planes[_BC_S] = msk(box_covered * small)
        planes[_BC_L] = msk(box_covered * large)
        planes[_MPIW_S] = msk(mpiw * small)
        planes[_MPIW_L] = msk(mpiw * large)
        if components:
            for c in range(4):
                planes[_N_BASE + c] = msk(covered[c])          # coord coverage sums
                planes[_N_BASE + 4 + c] = msk(scaled[c])       # width sums

        for k, p in enumerate(planes):
            sums_ref[0, k] = _fold(p, jnp.add)

        if components:
            for c in range(4):
                wmin_ref[0, c] = _fold(msk(scaled[c], jnp.inf), jnp.minimum)
                wmax_ref[0, c] = _fold(msk(scaled[c], -jnp.inf), jnp.maximum)

    if not needs_mask:
        emit(False)
    elif num_tiles == 1:
        emit(True)
    else:
        # Only the last tile pays for iota / masking.
        @pl.when(t < num_tiles - 1)
        def _():
            emit(False)

        @pl.when(t == num_tiles - 1)
        def _():
            emit(True)


def size_aware_symmetric_loss(pred_boxes, gt_boxes, predicted_widths, tau=1.0,
                              *,
                              small_target_coverage=0.9,    # accepted for API parity;
                              medium_target_coverage=0.89,  # torch's forward never uses
                              large_target_coverage=0.85,   # them (literals are hard-coded)
                              lambda_efficiency=0.35,
                              coverage_loss_type='smooth_l1',
                              size_normalization=True,
                              small_threshold=32.0,
                              large_threshold=96.0,
                              return_components=True,
                              max_tile_boxes=65536,
                              approx_reciprocal=True,
                              vmem_limit_bytes=48 * 1024 * 1024,
                              soa_inputs=False):
    if soa_inputs:
        n_boxes = int(pred_boxes.shape[1])
    else:
        n_boxes = int(pred_boxes.shape[0])

    # ---- lane-dense layout: boxes on the lane axis ---------------------------
    def prep(x):
        x = jnp.asarray(x)
        if x.dtype != jnp.float32:
            x = x.astype(jnp.float32)
        if not soa_inputs:
            x = x.T                                      # (4, N) -- one fused copy
        pad = (-n_boxes) % _LANE
        if pad:
            x = jnp.pad(x, ((0, 0), (0, pad)))           # fuses with the transpose
        return x.reshape(4, (n_boxes + pad) // _LANE, _LANE)

    pred3 = prep(pred_boxes)
    gt3 = prep(gt_boxes)
    w3 = prep(predicted_widths)

    # ---- tiling ---------------------------------------------------------------
    nb_rows = pl.cdiv(n_boxes, _LANE)                    # rows of 128 boxes
    max_rows = max(_SUB, (int(max_tile_boxes) // (_SUB * _LANE)) * _SUB)
    if nb_rows <= max_rows:
        rows, num_tiles = nb_rows, 1                     # single (possibly odd) tile
    else:
        rows = max_rows                                  # multiple of 8
        num_tiles = pl.cdiv(nb_rows, rows)               # ragged last block -> masked
    plane_rows = rows if (rows < _SUB or rows % _SUB) else _SUB
    needs_mask = (n_boxes != num_tiles * rows * _LANE)

    n_stats = _N_FULL if return_components else _N_BASE

    kernel = functools.partial(
        _size_aware_kernel,
        n_boxes=n_boxes, rows=rows, num_tiles=num_tiles, needs_mask=needs_mask,
        components=bool(return_components),
        small_threshold=float(small_threshold),
        large_threshold=float(large_threshold),
        size_normalization=bool(size_normalization),
        coverage_loss_type=coverage_loss_type,
        smooth_l1_beta=1.0, huber_delta=1.0,
        approx_reciprocal=bool(approx_reciprocal))

    in_spec = pl.BlockSpec((4, rows, _LANE), lambda t, tau_s: (0, t, 0))
    sum_spec = pl.BlockSpec((1, n_stats, plane_rows, _LANE),
                            lambda t, tau_s: (t, 0, 0, 0))
    out_specs = [sum_spec]
    out_shape = [jax.ShapeDtypeStruct((num_tiles, n_stats, plane_rows, _LANE),
                                      jnp.float32)]
    if return_components:
        w_spec = pl.BlockSpec((1, 4, plane_rows, _LANE), lambda t, tau_s: (t, 0, 0, 0))
        w_shape = jax.ShapeDtypeStruct((num_tiles, 4, plane_rows, _LANE), jnp.float32)
        out_specs += [w_spec, w_spec]
        out_shape += [w_shape, w_shape]

    tau_arr = jnp.full((1,), tau, dtype=jnp.float32)     # SMEM scalar: no recompile on tau change

    outs = pl.pallas_call(
        kernel,
        grid_spec=pltpu.PrefetchScalarGridSpec(
            num_scalar_prefetch=1,
            grid=(num_tiles,),
            in_specs=[in_spec, in_spec, in_spec],
            out_specs=tuple(out_specs)),
        out_shape=tuple(out_shape),
        compiler_params=pltpu.CompilerParams(
            dimension_semantics=("parallel",),            # independent per-tile partials
            vmem_limit_bytes=int(vmem_limit_bytes)),
    )(tau_arr, pred3, gt3, w3)

    # ---- tiny epilogue in plain JAX -------------------------------------------
    sums = jnp.sum(outs[0], axis=(0, 2, 3))              # (n_stats,)
    n = jnp.float32(n_boxes)

    coverage_loss = sums[_WCOV] / n
    efficiency_loss = sums[_EFF] / n
    coverage_rate = sums[_BC] / n
    avg_mpiw = sums[_MPIW] / n
    avg_normalized_mpiw = sums[_NORM] / n

    n_small = sums[_SMALL]
    n_large = sums[_LARGE]
    n_medium = n - n_small - n_large                      # derived (medium planes dropped)
    bc_small = sums[_BC_S]
    bc_large = sums[_BC_L]
    bc_medium = sums[_BC] - bc_small - bc_large
    mpiw_small_sum = sums[_MPIW_S]
    mpiw_large_sum = sums[_MPIW_L]
    mpiw_medium_sum = sums[_MPIW] - mpiw_small_sum - mpiw_large_sum

    def _masked_mean(total, count):
        return jnp.where(count > 0, total / jnp.maximum(count, 1.0), 0.0)

    small_coverage = _masked_mean(bc_small, n_small)
    medium_coverage = _masked_mean(bc_medium, n_medium)
    large_coverage = _masked_mean(bc_large, n_large)
    small_mpiw = _masked_mean(mpiw_small_sum, n_small)
    medium_mpiw = _masked_mean(mpiw_medium_sum, n_medium)
    large_mpiw = _masked_mean(mpiw_large_sum, n_large)

    # data-dependent python `if`s in torch -> jnp.where (thresholds hard-coded
    # in the reference forward too)
    pen = jnp.where((n_small > 0) & (small_coverage < 0.88),
                    (0.9 - small_coverage) ** 2 * 5.0, 0.0)
    med_pen = jnp.where(medium_coverage < 0.87,
                        (0.89 - medium_coverage) ** 2 * 3.0,
                        jnp.where(medium_coverage > 0.91,
                                  (medium_coverage - 0.89) ** 2 * 3.0, 0.0))
    pen = pen + jnp.where(n_medium > 0, med_pen, 0.0)
    pen = pen + jnp.where((n_large > 0) & (large_coverage > 0.87),
                          (large_coverage - 0.85) ** 2 * 5.0, 0.0)
    coverage_penalty = pen

    total_loss = coverage_loss + lambda_efficiency * efficiency_loss + coverage_penalty

    result = {
        'total': total_loss,
        'coverage': coverage_loss,
        'efficiency': efficiency_loss,
        'coverage_penalty': coverage_penalty,
        'coverage_rate': coverage_rate,
        'avg_mpiw': avg_mpiw,
        'normalized_mpiw': avg_normalized_mpiw,
        'small_coverage': small_coverage,
        'medium_coverage': medium_coverage,
        'large_coverage': large_coverage,
        'small_mpiw': small_mpiw,
        'medium_mpiw': medium_mpiw,
        'large_mpiw': large_mpiw,
    }
    if return_components:
        result.update({
            'coord_coverage': sums[_N_BASE:_N_BASE + 4] / n,       # (4,)
            'avg_widths': sums[_N_BASE + 4:_N_BASE + 8] / n,       # (4,)
            'min_widths': jnp.min(outs[1], axis=(0, 2, 3)),        # (4,)
            'max_widths': jnp.max(outs[2], axis=(0, 2, 3)),        # (4,)
        })
    return result


if __name__ == "__main__":
    key = jax.random.PRNGKey(0)
    k1, k2, k3, k4 = jax.random.split(key, 4)

    # small deterministic example: 8 boxes of (x1, y1, x2, y2)
    N = 8
    xy = jax.random.uniform(k1, (N, 2), minval=0.0, maxval=100.0)
    wh = jax.random.uniform(k2, (N, 2), minval=5.0, maxval=120.0)
    gt_boxes = jnp.concatenate([xy, xy + wh], axis=1).astype(jnp.float32)       # (N,4)
    pred_boxes = (gt_boxes + 2.0 * jax.random.normal(k3, (N, 4))).astype(jnp.float32)
    predicted_widths = jax.random.uniform(k4, (N, 4), minval=1.0, maxval=15.0
                                          ).astype(jnp.float32)

    # 1) single-tile, masked path, with component statistics
    res = size_aware_symmetric_loss(pred_boxes, gt_boxes, predicted_widths, tau=1.0)
    res = jax.block_until_ready(res)

    # 2) lean variant without component statistics
    res2 = size_aware_symmetric_loss(pred_boxes, gt_boxes, predicted_widths, tau=1.0,
                                     return_components=False)
    res2 = jax.block_until_ready(res2)

    # 3) multi-tile "parallel" grid with a ragged, masked last block
    M = 3000
    kk = jax.random.split(jax.random.PRNGKey(1), 4)
    xy2 = jax.random.uniform(kk[0], (M, 2), minval=0.0, maxval=800.0)
    wh2 = jax.random.uniform(kk[1], (M, 2), minval=4.0, maxval=200.0)
    gt2 = jnp.concatenate([xy2, xy2 + wh2], axis=1).astype(jnp.float32)
    pr2 = (gt2 + 3.0 * jax.random.normal(kk[2], (M, 4))).astype(jnp.float32)
    pw2 = jax.random.uniform(kk[3], (M, 4), minval=1.0, maxval=20.0).astype(jnp.float32)
    res3 = size_aware_symmetric_loss(pr2, gt2, pw2, tau=1.0, max_tile_boxes=2048)
    res3 = jax.block_until_ready(res3)

    print("KERNEL_OK")
</pallas_src>

<mosaic_0001>
module attributes {stable_mosaic.version = 11 : i64} {
  func.func @_size_aware_kernel(%arg0: i32, %arg1: memref<1xf32, #tpu.memory_space<smem>>, %arg2: memref<4x1x128xf32, #tpu.memory_space<vmem>>, %arg3: memref<4x1x128xf32, #tpu.memory_space<vmem>>, %arg4: memref<4x1x128xf32, #tpu.memory_space<vmem>>, %arg5: memref<1x19x1x128xf32, #tpu.memory_space<vmem>>, %arg6: memref<1x4x1x128xf32, #tpu.memory_space<vmem>>, %arg7: memref<1x4x1x128xf32, #tpu.memory_space<vmem>>) attributes {dimension_semantics = [#tpu.dimension_semantics<parallel>], iteration_bounds = array<i64: 1>, scalar_prefetch = 1 : i64, scratch_operands = 0 : i64, tpu.core_type = #tpu.core_type<tc>, window_params = [{transform_indices = @transform_0, window_bounds = array<i64: 4, 1, 128>}, {transform_indices = @transform_1, window_bounds = array<i64: 4, 1, 128>}, {transform_indices = @transform_2, window_bounds = array<i64: 4, 1, 128>}, {transform_indices = @transform_3, window_bounds = array<i64: 1, 19, 1, 128>}, {transform_indices = @transform_4, window_bounds = array<i64: 1, 4, 1, 128>}, {transform_indices = @transform_5, window_bounds = array<i64: 1, 4, 1, 128>}]} {
    %c0 = arith.constant 0 : index
    %0 = memref.load %arg1[%c0] : memref<1xf32, #tpu.memory_space<smem>>
    %c0_0 = arith.constant 0 : index
    %c0_1 = arith.constant 0 : index
    %c0_2 = arith.constant 0 : index
    %1 = vector.load %arg2[%c0_0, %c0_1, %c0_2] : memref<4x1x128xf32, #tpu.memory_space<vmem>>, vector<4x1x128xf32>
    %c0_3 = arith.constant 0 : index
    %c0_4 = arith.constant 0 : index
    %c0_5 = arith.constant 0 : index
    %2 = vector.load %arg3[%c0_3, %c0_4, %c0_5] : memref<4x1x128xf32, #tpu.memory_space<vmem>>, vector<4x1x128xf32>
    %c0_6 = arith.constant 0 : index
    %c0_7 = arith.constant 0 : index
    %c0_8 = arith.constant 0 : index
    %3 = vector.load %arg4[%c0_6, %c0_7, %c0_8] : memref<4x1x128xf32, #tpu.memory_space<vmem>>, vector<4x1x128xf32>
    %4 = vector.broadcast %0 : f32 to vector<4x1x128xf32>
    %5 = arith.mulf %3, %4 : vector<4x1x128xf32>
    %6 = arith.addf %1, %5 : vector<4x1x128xf32>
    %7 = arith.subf %2, %6 : vector<4x1x128xf32>
    %cst = arith.constant 0.000000e+00 : f32
    %8 = vector.broadcast %cst : f32 to vector<4x1x128xf32>
    %9 = arith.maximumf %7, %8 : vector<4x1x128xf32>
    %10 = arith.subf %1, %5 : vector<4x1x128xf32>
    %11 = arith.subf %10, %2 : vector<4x1x128xf32>
    %cst_9 = arith.constant 0.000000e+00 : f32
    %12 = vector.broadcast %cst_9 : f32 to vector<4x1x128xf32>
    %13 = arith.maximumf %11, %12 : vector<4x1x128xf32>
    %14 = arith.addf %9, %13 : vector<4x1x128xf32>
    %cst_10 = arith.constant 1.000000e+00 : f32
    %15 = vector.broadcast %cst_10 : f32 to vector<4x1x128xf32>
    %16 = arith.cmpf olt, %14, %15 : vector<4x1x128xf32>
    %cst_11 = arith.constant 5.000000e-01 : f32
    %17 = vector.broadcast %cst_11 : f32 to vector<4x1x128xf32>
    %18 = arith.mulf %17, %14 : vector<4x1x128xf32>
    %19 = arith.mulf %18, %14 : vector<4x1x128xf32>
    %cst_12 = arith.constant 1.000000e+00 : f32
    %20 = vector.broadcast %cst_12 : f32 to vector<4x1x128xf32>
    %21 = arith.divf %19, %20 : vector<4x1x128xf32>
    %cst_13 = arith.constant 5.000000e-01 : f32
    %22 = vector.broadcast %cst_13 : f32 to vector<4x1x128xf32>
    %23 = arith.subf %14, %22 : vector<4x1x128xf32>
    %24 = arith.select %16, %21, %23 : vector<4x1x128xi1>, vector<4x1x128xf32>
    %25 = vector.extract_strided_slice %24 {offsets = [0, 0, 0], sizes = [1, 1, 128], strides = [1, 1, 1]} : vector<4x1x128xf32> to vector<1x1x128xf32>
    %26 = vector.shape_cast %25 : vector<1x1x128xf32> to vector<1x128xf32>
    %27 = vector.extract_strided_slice %24 {offsets = [1, 0, 0], sizes = [1, 1, 128], strides = [1, 1, 1]} : vector<4x1x128xf32> to vector<1x1x128xf32>
    %28 = vector.shape_cast %27 : vector<1x1x128xf32> to vector<1x128xf32>
    %29 = arith.addf %26, %28 : vector<1x128xf32>
    %30 = vector.extract_strided_slice %24 {offsets = [2, 0, 0], sizes = [1, 1, 128], strides = [1, 1, 1]} : vector<4x1x128xf32> to vector<1x1x128xf32>
    %31 = vector.shape_cast %30 : vector<1x1x128xf32> to vector<1x128xf32>
    %32 = arith.addf %29, %31 : vector<1x128xf32>
    %33 = vector.extract_strided_slice %24 {offsets = [3, 0, 0], sizes = [1, 1, 128], strides = [1, 1, 1]} : vector<4x1x128xf32> to vector<1x1x128xf32>
    %34 = vector.shape_cast %33 : vector<1x1x128xf32> to vector<1x128xf32>
    %35 = arith.addf %32, %34 : vector<1x128xf32>
    %cst_14 = arith.constant 2.500000e-01 : f32
    %36 = vector.broadcast %cst_14 : f32 to vector<1x128xf32>
    %37 = arith.mulf %35, %36 : vector<1x128xf32>
    %38 = vector.extract_strided_slice %5 {offsets = [0, 0, 0], sizes = [1, 1, 128], strides = [1, 1, 1]} : vector<4x1x128xf32> to vector<1x1x128xf32>
    %39 = vector.shape_cast %38 : vector<1x1x128xf32> to vector<1x128xf32>
    %40 = vector.extract_strided_slice %5 {offsets = [1, 0, 0], sizes = [1, 1, 128], strides = [1, 1, 1]} : vector<4x1x128xf32> to vector<1x1x128xf32>
    %41 = vector.shape_cast %40 : vector<1x1x128xf32> to vector<1x128xf32>
    %42 = arith.addf %39, %41 : vector<1x128xf32>
    %43 = vector.extract_strided_slice %5 {offsets = [2, 0, 0], sizes = [1, 1, 128], strides = [1, 1, 1]} : vector<4x1x128xf32> to vector<1x1x128xf32>
    %44 = vector.shape_cast %43 : vector<1x1x128xf32> to vector<1x128xf32>
    %45 = arith.addf %42, %44 : vector<1x128xf32>
    %46 = vector.extract_strided_slice %5 {offsets = [3, 0, 0], sizes = [1, 1, 128], strides = [1, 1, 1]} : vector<4x1x128xf32> to vector<1x1x128xf32>
    %47 = vector.shape_cast %46 : vector<1x1x128xf32> to vector<1x128xf32>
    %48 = arith.addf %45, %47 : vector<1x128xf32>
    %cst_15 = arith.constant 5.000000e-01 : f32
    %49 = vector.broadcast %cst_15 : f32 to vector<1x128xf32>
    %50 = arith.mulf %48, %49 : vector<1x128xf32>
    %51 = vector.extract_strided_slice %2 {offsets = [2, 0, 0], sizes = [1, 1, 128], strides = [1, 1, 1]} : vector<4x1x128xf32> to vector<1x1x128xf32>
    %52 = vector.shape_cast %51 : vector<1x1x128xf32> to vector<1x128xf32>
    %53 = vector.extract_strided_slice %2 {offsets = [0, 0, 0], sizes = [1, 1, 128], strides = [1, 1, 1]} : vector<4x1x128xf32> to vector<1x1x128xf32>
    %54 = vector.shape_cast %53 : vector<1x1x128xf32> to vector<1x128xf32>
    %55 = arith.subf %52, %54 : vector<1x128xf32>
    %56 = vector.extract_strided_slice %2 {offsets = [3, 0, 0], sizes = [1, 1, 128], strides = [1, 1, 1]} : vector<4x1x128xf32> to vector<1x1x128xf32>
    %57 = vector.shape_cast %56 : vector<1x1x128xf32> to vector<1x128xf32>
    %58 = vector.extract_strided_slice %2 {offsets = [1, 0, 0], sizes = [1, 1, 128], strides = [1, 1, 1]} : vector<4x1x128xf32> to vector<1x1x128xf32>
    %59 = vector.shape_cast %58 : vector<1x1x128xf32> to vector<1x128xf32>
    %60 = arith.subf %57, %59 : vector<1x128xf32>
    %61 = arith.mulf %55, %60 : vector<1x128xf32>
    %cst_16 = arith.constant 0.000000e+00 : f32
    %62 = vector.broadcast %cst_16 : f32 to vector<1x128xf32>
    %63 = arith.cmpf oge, %61, %62 : vector<1x128xf32>
    %cst_17 = arith.constant 1.024000e+03 : f32
    %64 = vector.broadcast %cst_17 : f32 to vector<1x128xf32>
    %65 = arith.cmpf olt, %61, %64 : vector<1x128xf32>
    %66 = arith.andi %65, %63 : vector<1x128xi1>
    %67 = arith.extui %66 : vector<1x128xi1> to vector<1x128xi32>
    %68 = arith.sitofp %67 : vector<1x128xi32> to vector<1x128xf32>
    %cst_18 = arith.constant 9.216000e+03 : f32
    %69 = vector.broadcast %cst_18 : f32 to vector<1x128xf32>
    %70 = arith.cmpf ogt, %61, %69 : vector<1x128xf32>
    %71 = arith.extui %70 : vector<1x128xi1> to vector<1x128xi32>
    %72 = arith.sitofp %71 : vector<1x128xi32> to vector<1x128xf32>
    %cst_19 = arith.constant 0.000000e+00 : f32
    %73 = vector.broadcast %cst_19 : f32 to vector<4x1x128xf32>
    %74 = arith.cmpf ole, %14, %73 : vector<4x1x128xf32>
    %75 = arith.extui %74 : vector<4x1x128xi1> to vector<4x1x128xi32>
    %76 = arith.sitofp %75 : vector<4x1x128xi32> to vector<4x1x128xf32>
    %77 = vector.extract_strided_slice %76 {offsets = [0, 0, 0], sizes = [1, 1, 128], strides = [1, 1, 1]} : vector<4x1x128xf32> to vector<1x1x128xf32>
    %78 = vector.shape_cast %77 : vector<1x1x128xf32> to vector<1x128xf32>
    %79 = vector.extract_strided_slice %76 {offsets = [1, 0, 0], sizes = [1, 1, 128], strides = [1, 1, 1]} : vector<4x1x128xf32> to vector<1x1x128xf32>
    %80 = vector.shape_cast %79 : vector<1x1x128xf32> to vector<1x128xf32>
    %81 = arith.mulf %78, %80 : vector<1x128xf32>
    %82 = vector.extract_strided_slice %76 {offsets = [2, 0, 0], sizes = [1, 1, 128], strides = [1, 1, 1]} : vector<4x1x128xf32> to vector<1x1x128xf32>
    %83 = vector.shape_cast %82 : vector<1x1x128xf32> to vector<1x128xf32>
    %84 = arith.mulf %81, %83 : vector<1x128xf32>
    %85 = vector.extract_strided_slice %76 {offsets = [3, 0, 0], sizes = [1, 1, 128], strides = [1, 1, 1]} : vector<4x1x128xf32> to vector<1x1x128xf32>
    %86 = vector.shape_cast %85 : vector<1x1x128xf32> to vector<1x128xf32>
    %87 = arith.mulf %84, %86 : vector<1x128xf32>
    %cst_20 = arith.constant 5.000000e-01 : f32
    %88 = vector.broadcast %cst_20 : f32 to vector<1x128xf32>
    %89 = arith.mulf %88, %68 : vector<1x128xf32>
    %cst_21 = arith.constant 1.000000e+00 : f32
    %90 = vector.broadcast %cst_21 : f32 to vector<1x128xf32>
    %91 = arith.addf %90, %89 : vector<1x128xf32>
    %cst_22 = arith.constant 3.000000e-01 : f32
    %92 = vector.broadcast %cst_22 : f32 to vector<1x128xf32>
    %93 = arith.mulf %92, %72 : vector<1x128xf32>
    %94 = arith.subf %91, %93 : vector<1x128xf32>
    %95 = arith.mulf %37, %94 : vector<1x128xf32>
    %96 = arith.addf %55, %60 : vector<1x128xf32>
    %cst_23 = arith.constant 5.000000e-01 : f32
    %97 = vector.broadcast %cst_23 : f32 to vector<1x128xf32>
    %98 = arith.mulf %96, %97 : vector<1x128xf32>
    %cst_24 = arith.constant 1.000000e+00 : f32
    %99 = vector.broadcast %cst_24 : f32 to vector<1x128xf32>
    %100 = arith.addf %98, %99 : vector<1x128xf32>
    %101 = tpu.reciprocal %100 {approx = true} : vector<1x128xf32> -> vector<1x128xf32>
    %102 = arith.mulf %50, %101 : vector<1x128xf32>
    %cst_25 = arith.constant 5.000000e-01 : f32
    %103 = vector.broadcast %cst_25 : f32 to vector<1x128xf32>
    %104 = arith.mulf %103, %68 : vector<1x128xf32>
    %cst_26 = arith.constant 1.000000e+00 : f32
    %105 = vector.broadcast %cst_26 : f32 to vector<1x128xf32>
    %106 = arith.subf %105, %104 : vector<1x128xf32>
    %cst_27 = arith.constant 1.000000e+00 : f32
    %107 = vector.broadcast %cst_27 : f32 to vector<1x128xf32>
    %108 = arith.mulf %107, %72 : vector<1x128xf32>
    %109 = arith.addf %106, %108 : vector<1x128xf32>
    %110 = arith.mulf %102, %109 : vector<1x128xf32>
    %111 = tpu.iota {dimensions = array<i32: 0>} : vector<1x128xi32>
    %112 = tpu.iota {dimensions = array<i32: 1>} : vector<1x128xi32>
    %c1_i32 = arith.constant 1 : i32
    %113 = arith.muli %arg0, %c1_i32 : i32
    %114 = vector.broadcast %113 : i32 to vector<1x128xi32>
    %115 = arith.addi %114, %111 : vector<1x128xi32>
    %c128_i32 = arith.constant 128 : i32
    %116 = vector.broadcast %c128_i32 : i32 to vector<1x128xi32>
    %117 = arith.muli %115, %116 : vector<1x128xi32>
    %118 = arith.addi %117, %112 : vector<1x128xi32>
    %c8_i32 = arith.constant 8 : i32
    %119 = vector.broadcast %c8_i32 : i32 to vector<1x128xi32>
    %120 = arith.cmpi slt, %118, %119 : vector<1x128xi32>
    %cst_28 = arith.constant 0.000000e+00 : f32
    %121 = vector.broadcast %cst_28 : f32 to vector<1x128xf32>
    %122 = arith.select %120, %95, %121 : vector<1x128xi1>, vector<1x128xf32>
    %cst_29 = arith.constant 0.000000e+00 : f32
    %123 = vector.broadcast %cst_29 : f32 to vector<1x128xf32>
    %124 = arith.select %120, %110, %123 : vector<1x128xi1>, vector<1x128xf32>
    %cst_30 = arith.constant 0.000000e+00 : f32
    %125 = vector.broadcast %cst_30 : f32 to vector<1x128xf32>
    %126 = arith.select %120, %87, %125 : vector<1x128xi1>, vector<1x128xf32>
    %cst_31 = arith.constant 0.000000e+00 : f32
    %127 = vector.broadcast %cst_31 : f32 to vector<1x128xf32>
    %128 = arith.select %120, %50, %127 : vector<1x128xi1>, vector<1x128xf32>
    %cst_32 = arith.constant 0.000000e+00 : f32
    %129 = vector.broadcast %cst_32 : f32 to vector<1x128xf32>
    %130 = arith.select %120, %102, %129 : vector<1x128xi1>, vector<1x128xf32>
    %cst_33 = arith.constant 0.000000e+00 : f32
    %131 = vector.broadcast %cst_33 : f32 to vector<1x128xf32>
    %132 = arith.select %120, %68, %131 : vector<1x128xi1>, vector<1x128xf32>
    %cst_34 = arith.constant 0.000000e+00 : f32
    %133 = vector.broadcast %cst_34 : f32 to vector<1x128xf32>
    %134 = arith.select %120, %72, %133 : vector<1x128xi1>, vector<1x128xf32>
    %135 = arith.mulf %87, %68 : vector<1x128xf32>
    %cst_35 = arith.constant 0.000000e+00 : f32
    %136 = vector.broadcast %cst_35 : f32 to vector<1x128xf32>
    %137 = arith.select %120, %135, %136 : vector<1x128xi1>, vector<1x128xf32>
    %138 = arith.mulf %87, %72 : vector<1x128xf32>
    %cst_36 = arith.constant 0.000000e+00 : f32
    %139 = vector.broadcast %cst_36 : f32 to vector<1x128xf32>
    %140 = arith.select %120, %138, %139 : vector<1x128xi1>, vector<1x128xf32>
    %141 = arith.mulf %50, %68 : vector<1x128xf32>
    %cst_37 = arith.constant 0.000000e+00 : f32
    %142 = vector.broadcast %cst_37 : f32 to vector<1x128xf32>
    %143 = arith.select %120, %141, %142 : vector<1x128xi1>, vector<1x128xf32>
    %144 = arith.mulf %50, %72 : vector<1x128xf32>
    %cst_38 = arith.constant 0.000000e+00 : f32
    %145 = vector.broadcast %cst_38 : f32 to vector<1x128xf32>
    %146 = arith.select %120, %144, %145 : vector<1x128xi1>, vector<1x128xf32>
    %147 = vector.extract_strided_slice %76 {offsets = [0, 0, 0], sizes = [1, 1, 128], strides = [1, 1, 1]} : vector<4x1x128xf32> to vector<1x1x128xf32>
    %148 = vector.shape_cast %147 : vector<1x1x128xf32> to vector<1x128xf32>
    %cst_39 = arith.constant 0.000000e+00 : f32
    %149 = vector.broadcast %cst_39 : f32 to vector<1x128xf32>
    %150 = arith.select %120, %148, %149 : vector<1x128xi1>, vector<1x128xf32>
    %151 = vector.extract_strided_slice %5 {offsets = [0, 0, 0], sizes = [1, 1, 128], strides = [1, 1, 1]} : vector<4x1x128xf32> to vector<1x1x128xf32>
    %152 = vector.shape_cast %151 : vector<1x1x128xf32> to vector<1x128xf32>
    %cst_40 = arith.constant 0.000000e+00 : f32
    %153 = vector.broadcast %cst_40 : f32 to vector<1x128xf32>
    %154 = arith.select %120, %152, %153 : vector<1x128xi1>, vector<1x128xf32>
    %155 = vector.extract_strided_slice %76 {offsets = [1, 0, 0], sizes = [1, 1, 128], strides = [1, 1, 1]} : vector<4x1x128xf32> to vector<1x1x128xf32>
    %156 = vector.shape_cast %155 : vector<1x1x128xf32> to vector<1x128xf32>
    %cst_41 = arith.constant 0.000000e+00 : f32
    %157 = vector.broadcast %cst_41 : f32 to vector<1x128xf32>
    %158 = arith.select %120, %156, %157 : vector<1x128xi1>, vector<1x128xf32>
    %159 = vector.extract_strided_slice %5 {offsets = [1, 0, 0], sizes = [1, 1, 128], strides = [1, 1, 1]} : vector<4x1x128xf32> to vector<1x1x128xf32>
    %160 = vector.shape_cast %159 : vector<1x1x128xf32> to vector<1x128xf32>
    %cst_42 = arith.constant 0.000000e+00 : f32
    %161 = vector.broadcast %cst_42 : f32 to vector<1x128xf32>
    %162 = arith.select %120, %160, %161 : vector<1x128xi1>, vector<1x128xf32>
    %163 = vector.extract_strided_slice %76 {offsets = [2, 0, 0], sizes = [1, 1, 128], strides = [1, 1, 1]} : vector<4x1x128xf32> to vector<1x1x128xf32>
    %164 = vector.shape_cast %163 : vector<1x1x128xf32> to vector<1x128xf32>
    %cst_43 = arith.constant 0.000000e+00 : f32
    %165 = vector.broadcast %cst_43 : f32 to vector<1x128xf32>
    %166 = arith.select %120, %164, %165 : vector<1x128xi1>, vector<1x128xf32>
    %167 = vector.extract_strided_slice %5 {offsets = [2, 0, 0], sizes = [1, 1, 128], strides = [1, 1, 1]} : vector<4x1x128xf32> to vector<1x1x128xf32>
    %168 = vector.shape_cast %167 : vector<1x1x128xf32> to vector<1x128xf32>
    %cst_44 = arith.constant 0.000000e+00 : f32
    %169 = vector.broadcast %cst_44 : f32 to vector<1x128xf32>
    %170 = arith.select %120, %168, %169 : vector<1x128xi1>, vector<1x128xf32>
    %171 = vector.extract_strided_slice %76 {offsets = [3, 0, 0], sizes = [1, 1, 128], strides = [1, 1, 1]} : vector<4x1x128xf32> to vector<1x1x128xf32>
    %172 = vector.shape_cast %171 : vector<1x1x128xf32> to vector<1x128xf32>
    %cst_45 = arith.constant 0.000000e+00 : f32
    %173 = vector.broadcast %cst_45 : f32 to vector<1x128xf32>
    %174 = arith.select %120, %172, %173 : vector<1x128xi1>, vector<1x128xf32>
    %175 = vector.extract_strided_slice %5 {offsets = [3, 0, 0], sizes = [1, 1, 128], strides = [1, 1, 1]} : vector<4x1x128xf32> to vector<1x1x128xf32>
    %176 = vector.shape_cast %175 : vector<1x1x128xf32> to vector<1x128xf32>
    %cst_46 = arith.constant 0.000000e+00 : f32
    %177 = vector.broadcast %cst_46 : f32 to vector<1x128xf32>
    %178 = arith.select %120, %176, %177 : vector<1x128xi1>, vector<1x128xf32>
    %c0_47 = arith.constant 0 : index
    %c0_48 = arith.constant 0 : index
    %c0_49 = arith.constant 0 : index
    %c0_50 = arith.constant 0 : index
    %179 = vector.load %arg5[%c0_47, %c0_48, %c0_49, %c0_50] : memref<1x19x1x128xf32, #tpu.memory_space<vmem>>, vector<1x1x1x128xf32>
    %180 = vector.shape_cast %179 : vector<1x1x1x128xf32> to vector<1x128xf32>
    %181 = vector.shape_cast %122 : vector<1x128xf32> to vector<1x1x1x128xf32>
    tpu.vector_store %arg5[%c0_47, %c0_48, %c0_49, %c0_50], %181 {strides = array<i32>} : memref<1x19x1x128xf32, #tpu.memory_space<vmem>>, vector<1x1x1x128xf32>,
    %c0_51 = arith.constant 0 : index
    %c1 = arith.constant 1 : index
    %c0_52 = arith.constant 0 : index
    %c0_53 = arith.constant 0 : index
    %182 = vector.load %arg5[%c0_51, %c1, %c0_52, %c0_53] : memref<1x19x1x128xf32, #tpu.memory_space<vmem>>, vector<1x1x1x128xf32>
    %183 = vector.shape_cast %182 : vector<1x1x1x128xf32> to vector<1x128xf32>
    %184 = vector.shape_cast %124 : vector<1x128xf32> to vector<1x1x1x128xf32>
    tpu.vector_store %arg5[%c0_51, %c1, %c0_52, %c0_53], %184 {strides = array<i32>} : memref<1x19x1x128xf32, #tpu.memory_space<vmem>>, vector<1x1x1x128xf32>,
    %c0_54 = arith.constant 0 : index
    %c2 = arith.constant 2 : index
    %c0_55 = arith.constant 0 : index
    %c0_56 = arith.constant 0 : index
    %185 = vector.load %arg5[%c0_54, %c2, %c0_55, %c0_56] : memref<1x19x1x128xf32, #tpu.memory_space<vmem>>, vector<1x1x1x128xf32>
    %186 = vector.shape_cast %185 : vector<1x1x1x128xf32> to vector<1x128xf32>
    %187 = vector.shape_cast %126 : vector<1x128xf32> to vector<1x1x1x128xf32>
    tpu.vector_store %arg5[%c0_54, %c2, %c0_55, %c0_56], %187 {strides = array<i32>} : memref<1x19x1x128xf32, #tpu.memory_space<vmem>>, vector<1x1x1x128xf32>,
    %c0_57 = arith.constant 0 : index
    %c3 = arith.constant 3 : index
    %c0_58 = arith.constant 0 : index
    %c0_59 = arith.constant 0 : index
    %188 = vector.load %arg5[%c0_57, %c3, %c0_58, %c0_59] : memref<1x19x1x128xf32, #tpu.memory_space<vmem>>, vector<1x1x1x128xf32>
    %189 = vector.shape_cast %188 : vector<1x1x1x128xf32> to vector<1x128xf32>
    %190 = vector.shape_cast %128 : vector<1x128xf32> to vector<1x1x1x128xf32>
    tpu.vector_store %arg5[%c0_57, %c3, %c0_58, %c0_59], %190 {strides = array<i32>} : memref<1x19x1x128xf32, #tpu.memory_space<vmem>>, vector<1x1x1x128xf32>,
    %c0_60 = arith.constant 0 : index
    %c4 = arith.constant 4 : index
    %c0_61 = arith.constant 0 : index
    %c0_62 = arith.constant 0 : index
    %191 = vector.load %arg5[%c0_60, %c4, %c0_61, %c0_62] : memref<1x19x1x128xf32, #tpu.memory_space<vmem>>, vector<1x1x1x128xf32>
    %192 = vector.shape_cast %191 : vector<1x1x1x128xf32> to vector<1x128xf32>
    %193 = vector.shape_cast %130 : vector<1x128xf32> to vector<1x1x1x128xf32>
    tpu.vector_store %arg5[%c0_60, %c4, %c0_61, %c0_62], %193 {strides = array<i32>} : memref<1x19x1x128xf32, #tpu.memory_space<vmem>>, vector<1x1x1x128xf32>,
    %c0_63 = arith.constant 0 : index
    %c5 = arith.constant 5 : index
    %c0_64 = arith.constant 0 : index
    %c0_65 = arith.constant 0 : index
    %194 = vector.load %arg5[%c0_63, %c5, %c0_64, %c0_65] : memref<1x19x1x128xf32, #tpu.memory_space<vmem>>, vector<1x1x1x128xf32>
    %195 = vector.shape_cast %194 : vector<1x1x1x128xf32> to vector<1x128xf32>
    %196 = vector.shape_cast %132 : vector<1x128xf32> to vector<1x1x1x128xf32>
    tpu.vector_store %arg5[%c0_63, %c5, %c0_64, %c0_65], %196 {strides = array<i32>} : memref<1x19x1x128xf32, #tpu.memory_space<vmem>>, vector<1x1x1x128xf32>,
    %c0_66 = arith.constant 0 : index
    %c6 = arith.constant 6 : index
    %c0_67 = arith.constant 0 : index
    %c0_68 = arith.constant 0 : index
    %197 = vector.load %arg5[%c0_66, %c6, %c0_67, %c0_68] : memref<1x19x1x128xf32, #tpu.memory_space<vmem>>, vector<1x1x1x128xf32>
    %198 = vector.shape_cast %197 : vector<1x1x1x128xf32> to vector<1x128xf32>
    %199 = vector.shape_cast %134 : vector<1x128xf32> to vector<1x1x1x128xf32>
    tpu.vector_store %arg5[%c0_66, %c6, %c0_67, %c0_68], %199 {strides = array<i32>} : memref<1x19x1x128xf32, #tpu.memory_space<vmem>>, vector<1x1x1x128xf32>,
    %c0_69 = arith.constant 0 : index
    %c7 = arith.constant 7 : index
    %c0_70 = arith.constant 0 : index
    %c0_71 = arith.constant 0 : index
    %200 = vector.load %arg5[%c0_69, %c7, %c0_70, %c0_71] : memref<1x19x1x128xf32, #tpu.memory_space<vmem>>, vector<1x1x1x128xf32>
    %201 = vector.shape_cast %200 : vector<1x1x1x128xf32> to vector<1x128xf32>
    %202 = vector.shape_cast %137 : vector<1x128xf32> to vector<1x1x1x128xf32>
    tpu.vector_store %arg5[%c0_69, %c7, %c0_70, %c0_71], %202 {strides = array<i32>} : memref<1x19x1x128xf32, #tpu.memory_space<vmem>>, vector<1x1x1x128xf32>,
    %c0_72 = arith.constant 0 : index
    %c8 = arith.constant 8 : index
    %c0_73 = arith.constant 0 : index
    %c0_74 = arith.constant 0 : index
    %203 = vector.load %arg5[%c0_72, %c8, %c0_73, %c0_74] : memref<1x19x1x128xf32, #tpu.memory_space<vmem>>, vector<1x1x1x128xf32>
    %204 = vector.shape_cast %203 : vector<1x1x1x128xf32> to vector<1x128xf32>
    %205 = vector.shape_cast %140 : vector<1x128xf32> to vector<1x1x1x128xf32>
    tpu.vector_store %arg5[%c0_72, %c8, %c0_73, %c0_74], %205 {strides = array<i32>} : memref<1x19x1x128xf32, #tpu.memory_space<vmem>>, vector<1x1x1x128xf32>,
    %c0_75 = arith.constant 0 : index
    %c9 = arith.constant 9 : index
    %c0_76 = arith.constant 0 : index
    %c0_77 = arith.constant 0 : index
    %206 = vector.load %arg5[%c0_75, %c9, %c0_76, %c0_77] : memref<1x19x1x128xf32, #tpu.memory_space<vmem>>, vector<1x1x1x128xf32>
    %207 = vector.shape_cast %206 : vector<1x1x1x128xf32> to vector<1x128xf32>
    %208 = vector.shape_cast %143 : vector<1x128xf32> to vector<1x1x1x128xf32>
    tpu.vector_store %arg5[%c0_75, %c9, %c0_76, %c0_77], %208 {strides = array<i32>} : memref<1x19x1x128xf32, #tpu.memory_space<vmem>>, vector<1x1x1x128xf32>,
    %c0_78 = arith.constant 0 : index
    %c10 = arith.constant 10 : index
    %c0_79 = arith.constant 0 : index
    %c0_80 = arith.constant 0 : index
    %209 = vector.load %arg5[%c0_78, %c10, %c0_79, %c0_80] : memref<1x19x1x128xf32, #tpu.memory_space<vmem>>, vector<1x1x1x128xf32>
    %210 = vector.shape_cast %209 : vector<1x1x1x128xf32> to vector<1x128xf32>
    %211 = vector.shape_cast %146 : vector<1x128xf32> to vector<1x1x1x128xf32>
    tpu.vector_store %arg5[%c0_78, %c10, %c0_79, %c0_80], %211 {strides = array<i32>} : memref<1x19x1x128xf32, #tpu.memory_space<vmem>>, vector<1x1x1x128xf32>,
    %c0_81 = arith.constant 0 : index
    %c11 = arith.constant 11 : index
    %c0_82 = arith.constant 0 : index
    %c0_83 = arith.constant 0 : index
    %212 = vector.load %arg5[%c0_81, %c11, %c0_82, %c0_83] : memref<1x19x1x128xf32, #tpu.memory_space<vmem>>, vector<1x1x1x128xf32>
    %213 = vector.shape_cast %212 : vector<1x1x1x128xf32> to vector<1x128xf32>
    %214 = vector.shape_cast %150 : vector<1x128xf32> to vector<1x1x1x128xf32>
    tpu.vector_store %arg5[%c0_81, %c11, %c0_82, %c0_83], %214 {strides = array<i32>} : memref<1x19x1x128xf32, #tpu.memory_space<vmem>>, vector<1x1x1x128xf32>,
    %c0_84 = arith.constant 0 : index
    %c12 = arith.constant 12 : index
    %c0_85 = arith.constant 0 : index
    %c0_86 = arith.constant 0 : index
    %215 = vector.load %arg5[%c0_84, %c12, %c0_85, %c0_86] : memref<1x19x1x128xf32, #tpu.memory_space<vmem>>, vector<1x1x1x128xf32>
    %216 = vector.shape_cast %215 : vector<1x1x1x128xf32> to vector<1x128xf32>
    %217 = vector.shape_cast %158 : vector<1x128xf32> to vector<1x1x1x128xf32>
    tpu.vector_store %arg5[%c0_84, %c12, %c0_85, %c0_86], %217 {strides = array<i32>} : memref<1x19x1x128xf32, #tpu.memory_space<vmem>>, vector<1x1x1x128xf32>,
    %c0_87 = arith.constant 0 : index
    %c13 = arith.constant 13 : index
    %c0_88 = arith.constant 0 : index
    %c0_89 = arith.constant 0 : index
    %218 = vector.load %arg5[%c0_87, %c13, %c0_88, %c0_89] : memref<1x19x1x128xf32, #tpu.memory_space<vmem>>, vector<1x1x1x128xf32>
    %219 = vector.shape_cast %218 : vector<1x1x1x128xf32> to vector<1x128xf32>
    %220 = vector.shape_cast %166 : vector<1x128xf32> to vector<1x1x1x128xf32>
    tpu.vector_store %arg5[%c0_87, %c13, %c0_88, %c0_89], %220 {strides = array<i32>} : memref<1x19x1x128xf32, #tpu.memory_space<vmem>>, vector<1x1x1x128xf32>,
    %c0_90 = arith.constant 0 : index
    %c14 = arith.constant 14 : index
    %c0_91 = arith.constant 0 : index
    %c0_92 = arith.constant 0 : index
    %221 = vector.load %arg5[%c0_90, %c14, %c0_91, %c0_92] : memref<1x19x1x128xf32, #tpu.memory_space<vmem>>, vector<1x1x1x128xf32>
    %222 = vector.shape_cast %221 : vector<1x1x1x128xf32> to vector<1x128xf32>
    %223 = vector.shape_cast %174 : vector<1x128xf32> to vector<1x1x1x128xf32>
    tpu.vector_store %arg5[%c0_90, %c14, %c0_91, %c0_92], %223 {strides = array<i32>} : memref<1x19x1x128xf32, #tpu.memory_space<vmem>>, vector<1x1x1x128xf32>,
    %c0_93 = arith.constant 0 : index
    %c15 = arith.constant 15 : index
    %c0_94 = arith.constant 0 : index
    %c0_95 = arith.constant 0 : index
    %224 = vector.load %arg5[%c0_93, %c15, %c0_94, %c0_95] : memref<1x19x1x128xf32, #tpu.memory_space<vmem>>, vector<1x1x1x128xf32>
    %225 = vector.shape_cast %224 : vector<1x1x1x128xf32> to vector<1x128xf32>
    %226 = vector.shape_cast %154 : vector<1x128xf32> to vector<1x1x1x128xf32>
    tpu.vector_store %arg5[%c0_93, %c15, %c0_94, %c0_95], %226 {strides = array<i32>} : memref<1x19x1x128xf32, #tpu.memory_space<vmem>>, vector<1x1x1x128xf32>,
    %c0_96 = arith.constant 0 : index
    %c16 = arith.constant 16 : index
    %c0_97 = arith.constant 0 : index
    %c0_98 = arith.constant 0 : index
    %227 = vector.load %arg5[%c0_96, %c16, %c0_97, %c0_98] : memref<1x19x1x128xf32, #tpu.memory_space<vmem>>, vector<1x1x1x128xf32>
    %228 = vector.shape_cast %227 : vector<1x1x1x128xf32> to vector<1x128xf32>
    %229 = vector.shape_cast %162 : vector<1x128xf32> to vector<1x1x1x128xf32>
    tpu.vector_store %arg5[%c0_96, %c16, %c0_97, %c0_98], %229 {strides = array<i32>} : memref<1x19x1x128xf32, #tpu.memory_space<vmem>>, vector<1x1x1x128xf32>,
    %c0_99 = arith.constant 0 : index
    %c17 = arith.constant 17 : index
    %c0_100 = arith.constant 0 : index
    %c0_101 = arith.constant 0 : index
    %230 = vector.load %arg5[%c0_99, %c17, %c0_100, %c0_101] : memref<1x19x1x128xf32, #tpu.memory_space<vmem>>, vector<1x1x1x128xf32>
    %231 = vector.shape_cast %230 : vector<1x1x1x128xf32> to vector<1x128xf32>
    %232 = vector.shape_cast %170 : vector<1x128xf32> to vector<1x1x1x128xf32>
    tpu.vector_store %arg5[%c0_99, %c17, %c0_100, %c0_101], %232 {strides = array<i32>} : memref<1x19x1x128xf32, #tpu.memory_space<vmem>>, vector<1x1x1x128xf32>,
    %c0_102 = arith.constant 0 : index
    %c18 = arith.constant 18 : index
    %c0_103 = arith.constant 0 : index
    %c0_104 = arith.constant 0 : index
    %233 = vector.load %arg5[%c0_102, %c18, %c0_103, %c0_104] : memref<1x19x1x128xf32, #tpu.memory_space<vmem>>, vector<1x1x1x128xf32>
    %234 = vector.shape_cast %233 : vector<1x1x1x128xf32> to vector<1x128xf32>
    %235 = vector.shape_cast %178 : vector<1x128xf32> to vector<1x1x1x128xf32>
    tpu.vector_store %arg5[%c0_102, %c18, %c0_103, %c0_104], %235 {strides = array<i32>} : memref<1x19x1x128xf32, #tpu.memory_space<vmem>>, vector<1x1x1x128xf32>,
    %236 = vector.extract_strided_slice %5 {offsets = [0, 0, 0], sizes = [1, 1, 128], strides = [1, 1, 1]} : vector<4x1x128xf32> to vector<1x1x128xf32>
    %237 = vector.shape_cast %236 : vector<1x1x128xf32> to vector<1x128xf32>
    %cst_105 = arith.constant 0x7F800000 : f32
    %238 = vector.broadcast %cst_105 : f32 to vector<1x128xf32>
    %239 = arith.select %120, %237, %238 : vector<1x128xi1>, vector<1x128xf32>
    %c0_106 = arith.constant 0 : index
    %c0_107 = arith.constant 0 : index
    %c0_108 = arith.constant 0 : index
    %c0_109 = arith.constant 0 : index
    %240 = vector.load %arg6[%c0_106, %c0_107, %c0_108, %c0_109] : memref<1x4x1x128xf32, #tpu.memory_space<vmem>>, vector<1x1x1x128xf32>
    %241 = vector.shape_cast %240 : vector<1x1x1x128xf32> to vector<1x128xf32>
    %242 = vector.shape_cast %239 : vector<1x128xf32> to vector<1x1x1x128xf32>
    tpu.vector_store %arg6[%c0_106, %c0_107, %c0_108, %c0_109], %242 {strides = array<i32>} : memref<1x4x1x128xf32, #tpu.memory_space<vmem>>, vector<1x1x1x128xf32>,
    %243 = vector.extract_strided_slice %5 {offsets = [0, 0, 0], sizes = [1, 1, 128], strides = [1, 1, 1]} : vector<4x1x128xf32> to vector<1x1x128xf32>
    %244 = vector.shape_cast %243 : vector<1x1x128xf32> to vector<1x128xf32>
    %cst_110 = arith.constant 0xFF800000 : f32
    %245 = vector.broadcast %cst_110 : f32 to vector<1x128xf32>
    %246 = arith.select %120, %244, %245 : vector<1x128xi1>, vector<1x128xf32>
    %c0_111 = arith.constant 0 : index
    %c0_112 = arith.constant 0 : index
    %c0_113 = arith.constant 0 : index
    %c0_114 = arith.constant 0 : index
    %247 = vector.load %arg7[%c0_111, %c0_112, %c0_113, %c0_114] : memref<1x4x1x128xf32, #tpu.memory_space<vmem>>, vector<1x1x1x128xf32>
    %248 = vector.shape_cast %247 : vector<1x1x1x128xf32> to vector<1x128xf32>
    %249 = vector.shape_cast %246 : vector<1x128xf32> to vector<1x1x1x128xf32>
    tpu.vector_store %arg7[%c0_111, %c0_112, %c0_113, %c0_114], %249 {strides = array<i32>} : memref<1x4x1x128xf32, #tpu.memory_space<vmem>>, vector<1x1x1x128xf32>,
    %250 = vector.extract_strided_slice %5 {offsets = [1, 0, 0], sizes = [1, 1, 128], strides = [1, 1, 1]} : vector<4x1x128xf32> to vector<1x1x128xf32>
    %251 = vector.shape_cast %250 : vector<1x1x128xf32> to vector<1x128xf32>
    %cst_115 = arith.constant 0x7F800000 : f32
    %252 = vector.broadcast %cst_115 : f32 to vector<1x128xf32>
    %253 = arith.select %120, %251, %252 : vector<1x128xi1>, vector<1x128xf32>
    %c0_116 = arith.constant 0 : index
    %c1_117 = arith.constant 1 : index
    %c0_118 = arith.constant 0 : index
    %c0_119 = arith.constant 0 : index
    %254 = vector.load %arg6[%c0_116, %c1_117, %c0_118, %c0_119] : memref<1x4x1x128xf32, #tpu.memory_space<vmem>>, vector<1x1x1x128xf32>
    %255 = vector.shape_cast %254 : vector<1x1x1x128xf32> to vector<1x128xf32>
    %256 = vector.shape_cast %253 : vector<1x128xf32> to vector<1x1x1x128xf32>
    tpu.vector_store %arg6[%c0_116, %c1_117, %c0_118, %c0_119], %256 {strides = array<i32>} : memref<1x4x1x128xf32, #tpu.memory_space<vmem>>, vector<1x1x1x128xf32>,
    %257 = vector.extract_strided_slice %5 {offsets = [1, 0, 0], sizes = [1, 1, 128], strides = [1, 1, 1]} : vector<4x1x128xf32> to vector<1x1x128xf32>
    %258 = vector.shape_cast %257 : vector<1x1x128xf32> to vector<1x128xf32>
    %cst_120 = arith.constant 0xFF800000 : f32
    %259 = vector.broadcast %cst_120 : f32 to vector<1x128xf32>
    %260 = arith.select %120, %258, %259 : vector<1x128xi1>, vector<1x128xf32>
    %c0_121 = arith.constant 0 : index
    %c1_122 = arith.constant 1 : index
    %c0_123 = arith.constant 0 : index
    %c0_124 = arith.constant 0 : index
    %261 = vector.load %arg7[%c0_121, %c1_122, %c0_123, %c0_124] : memref<1x4x1x128xf32, #tpu.memory_space<vmem>>, vector<1x1x1x128xf32>
    %262 = vector.shape_cast %261 : vector<1x1x1x128xf32> to vector<1x128xf32>
    %263 = vector.shape_cast %260 : vector<1x128xf32> to vector<1x1x1x128xf32>
    tpu.vector_store %arg7[%c0_121, %c1_122, %c0_123, %c0_124], %263 {strides = array<i32>} : memref<1x4x1x128xf32, #tpu.memory_space<vmem>>, vector<1x1x1x128xf32>,
    %264 = vector.extract_strided_slice %5 {offsets = [2, 0, 0], sizes = [1, 1, 128], strides = [1, 1, 1]} : vector<4x1x128xf32> to vector<1x1x128xf32>
    %265 = vector.shape_cast %264 : vector<1x1x128xf32> to vector<1x128xf32>
    %cst_125 = arith.constant 0x7F800000 : f32
    %266 = vector.broadcast %cst_125 : f32 to vector<1x128xf32>
    %267 = arith.select %120, %265, %266 : vector<1x128xi1>, vector<1x128xf32>
    %c0_126 = arith.constant 0 : index
    %c2_127 = arith.constant 2 : index
    %c0_128 = arith.constant 0 : index
    %c0_129 = arith.constant 0 : index
    %268 = vector.load %arg6[%c0_126, %c2_127, %c0_128, %c0_129] : memref<1x4x1x128xf32, #tpu.memory_space<vmem>>, vector<1x1x1x128xf32>
    %269 = vector.shape_cast %268 : vector<1x1x1x128xf32> to vector<1x128xf32>
    %270 = vector.shape_cast %267 : vector<1x128xf32> to vector<1x1x1x128xf32>
    tpu.vector_store %arg6[%c0_126, %c2_127, %c0_128, %c0_129], %270 {strides = array<i32>} : memref<1x4x1x128xf32, #tpu.memory_space<vmem>>, vector<1x1x1x128xf32>,
    %271 = vector.extract_strided_slice %5 {offsets = [2, 0, 0], sizes = [1, 1, 128], strides = [1, 1, 1]} : vector<4x1x128xf32> to vector<1x1x128xf32>
    %272 = vector.shape_cast %271 : vector<1x1x128xf32> to vector<1x128xf32>
    %cst_130 = arith.constant 0xFF800000 : f32
    %273 = vector.broadcast %cst_130 : f32 to vector<1x128xf32>
    %274 = arith.select %120, %272, %273 : vector<1x128xi1>, vector<1x128xf32>
    %c0_131 = arith.constant 0 : index
    %c2_132 = arith.constant 2 : index
    %c0_133 = arith.constant 0 : index
    %c0_134 = arith.constant 0 : index
    %275 = vector.load %arg7[%c0_131, %c2_132, %c0_133, %c0_134] : memref<1x4x1x128xf32, #tpu.memory_space<vmem>>, vector<1x1x1x128xf32>
    %276 = vector.shape_cast %275 : vector<1x1x1x128xf32> to vector<1x128xf32>
    %277 = vector.shape_cast %274 : vector<1x128xf32> to vector<1x1x1x128xf32>
    tpu.vector_store %arg7[%c0_131, %c2_132, %c0_133, %c0_134], %277 {strides = array<i32>} : memref<1x4x1x128xf32, #tpu.memory_space<vmem>>, vector<1x1x1x128xf32>,
    %278 = vector.extract_strided_slice %5 {offsets = [3, 0, 0], sizes = [1, 1, 128], strides = [1, 1, 1]} : vector<4x1x128xf32> to vector<1x1x128xf32>
    %279 = vector.shape_cast %278 : vector<1x1x128xf32> to vector<1x128xf32>
    %cst_135 = arith.constant 0x7F800000 : f32
    %280 = vector.broadcast %cst_135 : f32 to vector<1x128xf32>
    %281 = arith.select %120, %279, %280 : vector<1x128xi1>, vector<1x128xf32>
    %c0_136 = arith.constant 0 : index
    %c3_137 = arith.constant 3 : index
    %c0_138 = arith.constant 0 : index
    %c0_139 = arith.constant 0 : index
    %282 = vector.load %arg6[%c0_136, %c3_137, %c0_138, %c0_139] : memref<1x4x1x128xf32, #tpu.memory_space<vmem>>, vector<1x1x1x128xf32>
    %283 = vector.shape_cast %282 : vector<1x1x1x128xf32> to vector<1x128xf32>
    %284 = vector.shape_cast %281 : vector<1x128xf32> to vector<1x1x1x128xf32>
    tpu.vector_store %arg6[%c0_136, %c3_137, %c0_138, %c0_139], %284 {strides = array<i32>} : memref<1x4x1x128xf32, #tpu.memory_space<vmem>>, vector<1x1x1x128xf32>,
    %285 = vector.extract_strided_slice %5 {offsets = [3, 0, 0], sizes = [1, 1, 128], strides = [1, 1, 1]} : vector<4x1x128xf32> to vector<1x1x128xf32>
    %286 = vector.shape_cast %285 : vector<1x1x128xf32> to vector<1x128xf32>
    %cst_140 = arith.constant 0xFF800000 : f32
    %287 = vector.broadcast %cst_140 : f32 to vector<1x128xf32>
    %288 = arith.select %120, %286, %287 : vector<1x128xi1>, vector<1x128xf32>
    %c0_141 = arith.constant 0 : index
    %c3_142 = arith.constant 3 : index
    %c0_143 = arith.constant 0 : index
    %c0_144 = arith.constant 0 : index
    %289 = vector.load %arg7[%c0_141, %c3_142, %c0_143, %c0_144] : memref<1x4x1x128xf32, #tpu.memory_space<vmem>>, vector<1x1x1x128xf32>
    %290 = vector.shape_cast %289 : vector<1x1x1x128xf32> to vector<1x128xf32>
    %291 = vector.shape_cast %288 : vector<1x128xf32> to vector<1x1x1x128xf32>
    tpu.vector_store %arg7[%c0_141, %c3_142, %c0_143, %c0_144], %291 {strides = array<i32>} : memref<1x4x1x128xf32, #tpu.memory_space<vmem>>, vector<1x1x1x128xf32>,
    return
  }
  func.func @transform_0(%arg0: i32, %arg1: memref<1xf32, #tpu.memory_space<smem>>) -> (i32, i32, i32) {
    %c0_i32 = arith.constant 0 : i32
    %c0_i32_0 = arith.constant 0 : i32
    %c0_i32_1 = arith.constant 0 : i32
    return %c0_i32, %arg0, %c0_i32_0 : i32, i32, i32
  }
  func.func @transform_1(%arg0: i32, %arg1: memref<1xf32, #tpu.memory_space<smem>>) -> (i32, i32, i32) {
    %c0_i32 = arith.constant 0 : i32
    %c0_i32_0 = arith.constant 0 : i32
    %c0_i32_1 = arith.constant 0 : i32
    return %c0_i32, %arg0, %c0_i32_0 : i32, i32, i32
  }
  func.func @transform_2(%arg0: i32, %arg1: memref<1xf32, #tpu.memory_space<smem>>) -> (i32, i32, i32) {
    %c0_i32 = arith.constant 0 : i32
    %c0_i32_0 = arith.constant 0 : i32
    %c0_i32_1 = arith.constant 0 : i32
    return %c0_i32, %arg0, %c0_i32_0 : i32, i32, i32
  }
  func.func @transform_3(%arg0: i32, %arg1: memref<1xf32, #tpu.memory_space<smem>>) -> (i32, i32, i32, i32) {
    %c0_i32 = arith.constant 0 : i32
    %c0_i32_0 = arith.constant 0 : i32
    %c0_i32_1 = arith.constant 0 : i32
    %c0_i32_2 = arith.constant 0 : i32
    return %arg0, %c0_i32, %c0_i32_0, %c0_i32_1 : i32, i32, i32, i32
  }
  func.func @transform_4(%arg0: i32, %arg1: memref<1xf32, #tpu.memory_space<smem>>) -> (i32, i32, i32, i32) {
    %c0_i32 = arith.constant 0 : i32
    %c0_i32_0 = arith.constant 0 : i32
    %c0_i32_1 = arith.constant 0 : i32
    %c0_i32_2 = arith.constant 0 : i32
    return %arg0, %c0_i32, %c0_i32_0, %c0_i32_1 : i32, i32, i32, i32
  }
  func.func @transform_5(%arg0: i32, %arg1: memref<1xf32, #tpu.memory_space<smem>>) -> (i32, i32, i32, i32) {
    %c0_i32 = arith.constant 0 : i32
    %c0_i32_0 = arith.constant 0 : i32
    %c0_i32_1 = arith.constant 0 : i32
    %c0_i32_2 = arith.constant 0 : i32
    return %arg0, %c0_i32, %c0_i32_0, %c0_i32_1 : i32, i32, i32, i32
  }
}

</mosaic_0001>

<llo_original>
// kernel: tpu_custom_call.1
$region0: #{tpu_custom_call.1}
  #allocation0 [shape = 'u32[]', space=smem, size = 0x4, offset = 0x4, fixed_abs, tag = 'smem constant byte address 0x4 - core index']
  #allocation1 [shape = 'u32[72,128]{1,0:T(1,128)}', space=vmem, size = 0x9000, scoped, tag = 'internal scratch']
  #allocation2 [shape = 's32[1]{0}', space=sflag, size = 0x4, scoped, tag = 'scoped memory for tpu_custom_call.1']
  #allocation3 [shape = 'f32[1]{0:T(128)S(6)}', space=smem, size = 0x200, scoped, tag = 'prefetched SMEM operand 0']
  %s0 = inlined_call_operand.<no memory space> [shape: f32[1], index: 0, kind: input, shape index: {}]
  %s1 = inlined_call_operand.hbm [shape: f32[4,1,128], index: 1, kind: input, shape index: {}]
  %s2 = inlined_call_operand.hbm [shape: f32[4,1,128], index: 2, kind: input, shape index: {}]
  %s3 = inlined_call_operand.hbm [shape: f32[4,1,128], index: 3, kind: input, shape index: {}]
  %s4 = inlined_call_operand.hbm [shape: f32[1,19,1,128], index: 4, kind: output, shape index: {0}]
  %s5 = inlined_call_operand.hbm [shape: f32[1,4,1,128], index: 5, kind: output, shape index: {1}]
  %s6 = inlined_call_operand.hbm [shape: f32[1,4,1,128], index: 6, kind: output, shape index: {2}]
  %7 = xla_tuple %s4, %s5, %s6
  %s8 = sld [smem:[#allocation0]]
  $region50: #{tpu_custom_call.1} parent=0
    _
  %s10 = ssub.s32 1, %s8
  %s11 = scalar_select 0, %s10, %s8
  %12 = sst [smem:[#allocation3]] %s0
  $region1: #{tpu_custom_call.1} parent=0
    #allocation4 [shape = 'u8[2048]{0}', space=vmem, size = 0x800, scoped, tag = 'input window, operand 1, single buffered']
    #allocation5 [shape = 's32[1]{0}', space=sflag, size = 0x4, scoped, tag = 'scoped memory for tpu_custom_call.1']
    #allocation6 [shape = 's32[1]{0}', space=sflag, size = 0x4, scoped, tag = 'scoped memory for tpu_custom_call.1']
    #allocation7 [shape = 'u8[2048]{0}', space=vmem, size = 0x800, scoped, tag = 'input window, operand 2, single buffered']
    #allocation8 [shape = 's32[1]{0}', space=sflag, size = 0x4, scoped, tag = 'scoped memory for tpu_custom_call.1']
    #allocation9 [shape = 'u8[2048]{0}', space=vmem, size = 0x800, scoped, tag = 'input window, operand 3, single buffered']
    #allocation10 [shape = 'u8[9728]{0}', space=vmem, size = 0x2800, scoped, tag = 'output window, operand 0, single buffered']
    #allocation11 [shape = 'u8[2048]{0}', space=vmem, size = 0x800, scoped, tag = 'output window, operand 1, single buffered']
    #allocation12 [shape = 's32[1]{0}', space=sflag, size = 0x4, scoped, tag = 'scoped memory for tpu_custom_call.1']
    #allocation13 [shape = 'u8[2048]{0}', space=vmem, size = 0x800, scoped, tag = 'output window, operand 2, single buffered']
    %13 = vsyncpa [#allocation5], 0
    %14 = vsyncpa [#allocation8], 0
    %15 = vsyncpa [#allocation6], 0
    %16 = vsyncpa [#allocation12], 0
    // Predicated region
    $region2: #{tpu_custom_call.1} parent=1 // pred_check
      _
    $region3: #{tpu_custom_call.1} parent=1 // pred_check_branch
      %18 = sbr.rel (0) target = $region5
    $region4: #{tpu_custom_call.1} parent=1 // pred_region
      %20 = vsyncadd [#allocation5], 0
      %s21 = sshll.u32 %s1, 4
      %s22 = int_to_ptr.hbm [resolvable:$true] %s21
      %s23 = sshll.u32 [#allocation4], 4
      %s24 = int_to_ptr.vmem [resolvable:$true] %s23
      %29 = dma.hbm_to_vmem [thread:$0]  %s22, 64, %s24, [#allocation5], 16, 16, 1
    $region5: #{tpu_custom_call.1} parent=1 // pred_fallthru
      _
    // Predicated region
    $region6: #{tpu_custom_call.1} parent=1 // pred_check
      _
    $region7: #{tpu_custom_call.1} parent=1 // pred_check_branch
      %31 = sbr.rel (0) target = $region9
    $region8: #{tpu_custom_call.1} parent=1 // pred_region
      %33 = vsyncadd [#allocation8], 0
      %s34 = sshll.u32 %s2, 4
      %s35 = int_to_ptr.hbm [resolvable:$true] %s34
      %s36 = sshll.u32 [#allocation7], 4
      %s37 = int_to_ptr.vmem [resolvable:$true] %s36
      %42 = dma.hbm_to_vmem [thread:$0]  %s35, 64, %s37, [#allocation8], 16, 16, 1
    $region9: #{tpu_custom_call.1} parent=1 // pred_fallthru
      _
    // Predicated region
    $region10: #{tpu_custom_call.1} parent=1 // pred_check
      _
    $region11: #{tpu_custom_call.1} parent=1 // pred_check_branch
      %44 = sbr.rel (0) target = $region13
    $region12: #{tpu_custom_call.1} parent=1 // pred_region
      %46 = vsyncadd [#allocation8], 0
      %s47 = sshll.u32 %s3, 4
      %s48 = int_to_ptr.hbm [resolvable:$true] %s47
      %s49 = sshll.u32 [#allocation9], 4
      %s50 = int_to_ptr.vmem [resolvable:$true] %s49
      %55 = dma.hbm_to_vmem [thread:$0]  %s48, 64, %s50, [#allocation8], 16, 16, 1
    $region13: #{tpu_custom_call.1} parent=1 // pred_fallthru
      _
    // Predicated region
    $region14: #{tpu_custom_call.1} parent=1 // pred_check
      _
    $region15: #{tpu_custom_call.1} parent=1 // pred_check_branch
      %57 = sbr.rel (0) target = $region17
    $region16: #{tpu_custom_call.1} parent=1 // pred_region
      %59 = dma.done [#allocation5], 64
    $region17: #{tpu_custom_call.1} parent=1 // pred_fallthru
      _
    // Predicated region
    $region18: #{tpu_custom_call.1} parent=1 // pred_check
      _
    $region19: #{tpu_custom_call.1} parent=1 // pred_check_branch
      %61 = sbr.rel (0) target = $region21
    $region20: #{tpu_custom_call.1} parent=1 // pred_region
      %63 = dma.done [#allocation8], 64
    $region21: #{tpu_custom_call.1} parent=1 // pred_fallthru
      _
    // Predicated region
    $region22: #{tpu_custom_call.1} parent=1 // pred_check
      _
    $region23: #{tpu_custom_call.1} parent=1 // pred_check_branch
      %65 = sbr.rel (0) target = $region25
    $region24: #{tpu_custom_call.1} parent=1 // pred_region
      %67 = dma.done [#allocation8], 64
    $region25: #{tpu_custom_call.1} parent=1 // pred_fallthru
      _
    %s68 = sld [smem:[#allocation3]]
    %v69 = vld [vmem:[#allocation4] sm:$0x1]
    %v70 = vld [vmem:[#allocation4 + $0x1] sm:$0x1]
    %v71 = vld [vmem:[#allocation4 + $0x2] sm:$0x1]
    %v72 = vld [vmem:[#allocation4 + $0x3] sm:$0x1]
    %v73 = vld [vmem:[#allocation7] sm:$0x1]
    %v74 = vld [vmem:[#allocation7 + $0x1] sm:$0x1]
    %v75 = vld [vmem:[#allocation7 + $0x2] sm:$0x1]
    %v76 = vld [vmem:[#allocation7 + $0x3] sm:$0x1]
    %v77 = vld [vmem:[#allocation9] sm:$0x1]
    %v78 = vld [vmem:[#allocation9 + $0x1] sm:$0x1]
    %v79 = vld [vmem:[#allocation9 + $0x2] sm:$0x1]
    %v80 = vld [vmem:[#allocation9 + $0x3] sm:$0x1]
    %v81 = vstv %s68
    %v82 = vmul.f32 %v77, %v81
    %v83 = vmul.f32 %v78, %v81
    %v84 = vmul.f32 %v79, %v81
    %v85 = vmul.f32 %v80, %v81
    %v86 = vadd.f32 %v69, %v82
    %v87 = vadd.f32 %v70, %v83
    %v88 = vadd.f32 %v71, %v84
    %v89 = vadd.f32 %v72, %v85
    %v90 = vsub.f32 %v73, %v86
    %v91 = vsub.f32 %v74, %v87
    %v92 = vsub.f32 %v75, %v88
    %v93 = vsub.f32 %v76, %v89
    %v94 = vmax.f32 %v90, 0.0
    %v95 = vmax.f32 %v91, 0.0
    %v96 = vmax.f32 %v92, 0.0
    %v97 = vmax.f32 %v93, 0.0
    %v98 = vsub.f32 %v69, %v82
    %v99 = vsub.f32 %v70, %v83
    %v100 = vsub.f32 %v71, %v84
    %v101 = vsub.f32 %v72, %v85
    %v102 = vsub.f32 %v98, %v73
    %v103 = vsub.f32 %v99, %v74
    %v104 = vsub.f32 %v100, %v75
    %v105 = vsub.f32 %v101, %v76
    %v106 = vmax.f32 %v102, 0.0
    %v107 = vmax.f32 %v103, 0.0
    %v108 = vmax.f32 %v104, 0.0
    %v109 = vmax.f32 %v105, 0.0
    %v110 = vadd.f32 %v94, %v106
    %v111 = vadd.f32 %v95, %v107
    %v112 = vadd.f32 %v96, %v108
    %v113 = vadd.f32 %v97, %v109
    %vm114 = vcmp.lt.f32.partialorder %v110, 1.0
    %vm115 = vcmp.lt.f32.partialorder %v111, 1.0
    %vm116 = vcmp.lt.f32.partialorder %v112, 1.0
    %vm117 = vcmp.lt.f32.partialorder %v113, 1.0
    %v118 = vmul.f32 %v110, 0.5
    %v119 = vmul.f32 %v111, 0.5
    %v120 = vmul.f32 %v112, 0.5
    %v121 = vmul.f32 %v113, 0.5
    %v122 = vmul.f32 %v118, %v110
    %v123 = vmul.f32 %v119, %v111
    %v124 = vmul.f32 %v120, %v112
    %v125 = vmul.f32 %v121, %v113
    %v126 = vsub.f32 %v110, 0.5
    %v127 = vsub.f32 %v111, 0.5
    %v128 = vsub.f32 %v112, 0.5
    %v129 = vsub.f32 %v113, 0.5
    %v130 = vsel %vm114, %v122, %v126
    %v131 = vsel %vm115, %v123, %v127
    %v132 = vsel %vm116, %v124, %v128
    %v133 = vsel %vm117, %v125, %v129
    %v134 = vadd.f32 %v130, %v131
    %v135 = vadd.f32 %v134, %v132
    %v136 = vadd.f32 %v135, %v133
    %v137 = vmul.f32 %v136, 0.25
    %v138 = vadd.f32 %v82, %v83
    %v139 = vadd.f32 %v138, %v84
    %v140 = vadd.f32 %v139, %v85
    %v141 = vmul.f32 %v140, 0.5
    %v142 = vsub.f32 %v75, %v73
    %v143 = vsub.f32 %v76, %v74
    %v144 = vmul.f32 %v142, %v143
    %vm145 = vcmp.ge.f32.partialorder %v144, 0.0
    %vm146 = vcmp.lt.f32.partialorder %v144, 1024.0
    %vm147 = vmand %vm146, %vm145
    %v148 = vsel %vm147, 1, 0
    %v149 = vcvt.s32.f32 %v148
    %vm150 = vcmp.gt.f32.partialorder %v144, 9216.0
    %v151 = vsel %vm150, 1, 0
    %v152 = vcvt.s32.f32 %v151
    %vm153 = vcmp.le.f32.partialorder %v110, 0.0
    %vm154 = vcmp.le.f32.partialorder %v111, 0.0
    %vm155 = vcmp.le.f32.partialorder %v112, 0.0
    %vm156 = vcmp.le.f32.partialorder %v113, 0.0
    %v157 = vsel %vm153, 1, 0
    %v158 = vsel %vm154, 1, 0
    %v159 = vsel %vm155, 1, 0
    %v160 = vsel %vm156, 1, 0
    %v161 = vcvt.s32.f32 %v157
    %v162 = vcvt.s32.f32 %v158
    %v163 = vcvt.s32.f32 %v159
    %v164 = vcvt.s32.f32 %v160
    %v165 = vmul.f32 %v161, %v162
    %v166 = vmul.f32 %v165, %v163
    %v167 = vmul.f32 %v166, %v164
    %v168 = vmul.f32 %v149, 0.5
    %v169 = vadd.f32 %v168, 1.0
    %v170 = vmul.f32 %v152, 0.3
    %v171 = vsub.f32 %v169, %v170
    %v172 = vmul.f32 %v137, %v171
    %v173 = vadd.f32 %v142, %v143
    %v174 = vmul.f32 %v173, 0.5
    %v175 = vadd.f32 %v174, 1.0
    %v176 = vrcp.pop %v175
    %v177 = vmul.f32 %v141, %v176
    %v178 = vsub.f32 1.0, %v168
    %v179 = vadd.f32 %v178, %v152
    %v180 = vmul.f32 %v177, %v179
    %v181 = vlaneseq
    %v182 = vshrl.u32 %v181, 7
    %v183 = vlaneseq
    %v184 = vand.u32 %v183, 127
    %v185 = vstv 0
    %v186 = vadd.s32 %v185, %v182
    %v187 = vmul.u32 %v186, 128
    %v188 = vadd.s32 %v187, %v184
    %vm189 = vcmp.lt.s32.totalorder %v188, 8
    %v190 = vsel %vm189, %v172, 0.0
    %v191 = vsel %vm189, %v180, 0.0
    %v192 = vsel %vm189, %v167, 0.0
    %v193 = vsel %vm189, %v141, 0.0
    %v194 = vsel %vm189, %v177, 0.0
    %v195 = vsel %vm189, %v149, 0.0
    %v196 = vsel %vm189, %v152, 0.0
    %v197 = vmul.f32 %v167, %v149
    %v198 = vsel %vm189, %v197, 0.0
    %v199 = vmul.f32 %v167, %v152
    %v200 = vsel %vm189, %v199, 0.0
    %v201 = vmul.f32 %v141, %v149
    %v202 = vsel %vm189, %v201, 0.0
    %v203 = vmul.f32 %v141, %v152
    %v204 = vsel %vm189, %v203, 0.0
    %v205 = vsel %vm189, %v161, 0.0
    %v206 = vsel %vm189, %v82, 0.0
    %v207 = vsel %vm189, %v162, 0.0
    %v208 = vsel %vm189, %v83, 0.0
    %v209 = vsel %vm189, %v163, 0.0
    %v210 = vsel %vm189, %v84, 0.0
    %v211 = vsel %vm189, %v164, 0.0
    %v212 = vsel %vm189, %v85, 0.0
    %213 = vst [vmem:[#allocation10] sm:$0x1] %v190
    %s214 = scalar_lea.vmem [#allocation10], 1
    %215 = vst [vmem:[%s214] sm:$0x1] %v191
    %s216 = scalar_lea.vmem [#allocation10], 2
    %217 = vst [vmem:[%s216] sm:$0x1] %v192
    %s218 = scalar_lea.vmem [#allocation10], 3
    %219 = vst [vmem:[%s218] sm:$0x1] %v193
    %s220 = scalar_lea.vmem [#allocation10], 4
    %221 = vst [vmem:[%s220] sm:$0x1] %v194
    %s222 = scalar_lea.vmem [#allocation10], 5
    %223 = vst [vmem:[%s222] sm:$0x1] %v195
    %s224 = scalar_lea.vmem [#allocation10], 6
    %225 = vst [vmem:[%s224] sm:$0x1] %v196
    %s226 = scalar_lea.vmem [#allocation10], 7
    %227 = vst [vmem:[%s226] sm:$0x1] %v198
    %s228 = scalar_lea.vmem [#allocation10], 8
    %229 = vst [vmem:[%s228] sm:$0x1] %v200
    %s230 = scalar_lea.vmem [#allocation10], 9
    %231 = vst [vmem:[%s230] sm:$0x1] %v202
    %s232 = scalar_lea.vmem [#allocation10], 10
    %233 = vst [vmem:[%s232] sm:$0x1] %v204
    %s234 = scalar_lea.vmem [#allocation10], 11
    %235 = vst [vmem:[%s234] sm:$0x1] %v205
    %s236 = scalar_lea.vmem [#allocation10], 12
    %237 = vst [vmem:[%s236] sm:$0x1] %v207
    %s238 = scalar_lea.vmem [#allocation10], 13
    %239 = vst [vmem:[%s238] sm:$0x1] %v209
    %s240 = scalar_lea.vmem [#allocation10], 14
    %241 = vst [vmem:[%s240] sm:$0x1] %v211
    %s242 = scalar_lea.vmem [#allocation10], 15
    %243 = vst [vmem:[%s242] sm:$0x1] %v206
    %s244 = scalar_lea.vmem [#allocation10], 16
    %245 = vst [vmem:[%s244] sm:$0x1] %v208
    %s246 = scalar_lea.vmem [#allocation10], 17
    %247 = vst [vmem:[%s246] sm:$0x1] %v210
    %s248 = scalar_lea.vmem [#allocation10], 18
    %249 = vst [vmem:[%s248] sm:$0x1] %v212
    %v250 = vsel %vm189, %v82, inf
    %251 = vst [vmem:[#allocation11] sm:$0x1] %v250
    %v252 = vsel %vm189, %v82, -inf
    %253 = vst [vmem:[#allocation13] sm:$0x1] %v252
    %v254 = vsel %vm189, %v83, inf
    %s255 = scalar_lea.vmem [#allocation11], 1
    %256 = vst [vmem:[%s255] sm:$0x1] %v254
    %v257 = vsel %vm189, %v83, -inf
    %s258 = scalar_lea.vmem [#allocation13], 1
    %259 = vst [vmem:[%s258] sm:$0x1] %v257
    %v260 = vsel %vm189, %v84, inf
    %s261 = scalar_lea.vmem [#allocation11], 2
    %262 = vst [vmem:[%s261] sm:$0x1] %v260
    %v263 = vsel %vm189, %v84, -inf
    %s264 = scalar_lea.vmem [#allocation13], 2
    %265 = vst [vmem:[%s264] sm:$0x1] %v263
    %v266 = vsel %vm189, %v85, inf
    %s267 = scalar_lea.vmem [#allocation11], 3
    %268 = vst [vmem:[%s267] sm:$0x1] %v266
    %v269 = vsel %vm189, %v85, -inf
    %s270 = scalar_lea.vmem [#allocation13], 3
    %271 = vst [vmem:[%s270] sm:$0x1] %v269
    // Predicated region
    $region26: #{tpu_custom_call.1} parent=1 // pred_check
      _
    $region27: #{tpu_custom_call.1} parent=1 // pred_check_branch
      %273 = sbr.rel (0) target = $region29
    $region28: #{tpu_custom_call.1} parent=1 // pred_region
      %275 = vsyncadd [#allocation6], 0
      %s276 = sshll.u32 [#allocation10], 4
      %s277 = int_to_ptr.vmem [resolvable:$true] %s276
      %s278 = sshll.u32 %s4, 4
      %s279 = int_to_ptr.hbm [resolvable:$true] %s278
      %284 = dma.vmem_to_hbm [thread:$0]  %s277, 304, %s279, [#allocation6], 16, 16, 1
    $region29: #{tpu_custom_call.1} parent=1 // pred_fallthru
      _
    // Predicated region
    $region30: #{tpu_custom_call.1} parent=1 // pred_check
      _
    $region31: #{tpu_custom_call.1} parent=1 // pred_check_branch
      %286 = sbr.rel (0) target = $region33
    $region32: #{tpu_custom_call.1} parent=1 // pred_region
      %288 = vsyncadd [#allocation12], 0
      %s289 = sshll.u32 [#allocation11], 4
      %s290 = int_to_ptr.vmem [resolvable:$true] %s289
      %s291 = sshll.u32 %s5, 4
      %s292 = int_to_ptr.hbm [resolvable:$true] %s291
      %297 = dma.vmem_to_hbm [thread:$0]  %s290, 64, %s292, [#allocation12], 16, 16, 1
    $region33: #{tpu_custom_call.1} parent=1 // pred_fallthru
      _
    // Predicated region
    $region34: #{tpu_custom_call.1} parent=1 // pred_check
      _
    $region35: #{tpu_custom_call.1} parent=1 // pred_check_branch
      %299 = sbr.rel (0) target = $region37
    $region36: #{tpu_custom_call.1} parent=1 // pred_region
      %301 = vsyncadd [#allocation12], 0
      %s302 = sshll.u32 [#allocation13], 4
      %s303 = int_to_ptr.vmem [resolvable:$true] %s302
      %s304 = sshll.u32 %s6, 4
      %s305 = int_to_ptr.hbm [resolvable:$true] %s304
      %310 = dma.vmem_to_hbm [thread:$0]  %s303, 64, %s305, [#allocation12], 16, 16, 1
    $region37: #{tpu_custom_call.1} parent=1 // pred_fallthru
      _
    // Predicated region
    $region38: #{tpu_custom_call.1} parent=1 // pred_check
      _
    $region39: #{tpu_custom_call.1} parent=1 // pred_check_branch
      %312 = sbr.rel (0) target = $region41
    $region40: #{tpu_custom_call.1} parent=1 // pred_region
      %314 = dma.done [#allocation6], 304
    $region41: #{tpu_custom_call.1} parent=1 // pred_fallthru
      _
    // Predicated region
    $region42: #{tpu_custom_call.1} parent=1 // pred_check
      _
    $region43: #{tpu_custom_call.1} parent=1 // pred_check_branch
      %316 = sbr.rel (0) target = $region45
    $region44: #{tpu_custom_call.1} parent=1 // pred_region
      %318 = dma.done [#allocation12], 64
    $region45: #{tpu_custom_call.1} parent=1 // pred_fallthru
      _
    // Predicated region
    $region46: #{tpu_custom_call.1} parent=1 // pred_check
      _
    $region47: #{tpu_custom_call.1} parent=1 // pred_check_branch
      %320 = sbr.rel (0) target = $region49
    $region48: #{tpu_custom_call.1} parent=1 // pred_region
      %322 = dma.done [#allocation12], 64
    $region49: #{tpu_custom_call.1} parent=1 // pred_fallthru
      _
    %323 = vsyncpa [#allocation5], 1
    %324 = vsyncpa [#allocation8], 1
    %325 = vsyncpa [#allocation6], 1
    %326 = vsyncpa [#allocation12], 1

</llo_original>
